<compile_context>
chip_gen: v5e
topology: v5e:2x2
jax: 0.10.0
libtpu: 0.0.40
codegen_flags: <defaults>
</compile_context>

<pallas_src>
import functools

import jax
import jax.numpy as jnp
from jax.experimental import pallas as pl
from jax.experimental.pallas import tpu as pltpu

_EPS = 1e-5


def _round_up(x, m):
    return ((x + m - 1) // m) * m


def _accumulate(acc_ref, term):
    """Reduce term [B, h, W] into the (8, W) accumulator using VPU-only adds."""
    x = term.sum(axis=0) if term.shape[0] > 1 else term[0]   # [h, W]
    r, w = x.shape
    if r >= 8:
        r8 = (r // 8) * 8
        acc_ref[...] += x[:r8].reshape(r8 // 8, 8, w).sum(axis=0)
        rem = r - r8
        if rem:
            acc_ref[0:rem, :] += x[r8:, :]
    else:
        acc_ref[0:r, :] += x


def _wce_kernel(p_ref, t_ref, out_ref, acc_ref, *, h, h_tile, total_blocks,
                inner_steps, may_overrun):
    c = pl.program_id(0)
    i = pl.program_id(1)
    blk = c * inner_steps + i

    # Zero the small accumulator at the start of each chunk's reduction.
    @pl.when(i == 0)
    def _():
        acc_ref[...] = jnp.zeros_like(acc_ref)

    t = t_ref[...].astype(jnp.float32)              # [B, h_tile, W]
    p0 = p_ref[:, 0, :, :].astype(jnp.float32)      # channel 0
    p1 = p_ref[:, 1, :, :].astype(jnp.float32)      # channel 1
    # targets * log(pred1 + eps) + (1 - targets) * log(pred0 + eps)
    term = t * jnp.log(p1 + _EPS) + (1.0 - t) * jnp.log(p0 + _EPS)

    ragged = (total_blocks * h_tile) != h           # static Python bool
    if ragged:
        # Only the single boundary block carries rows past H (garbage rows in
        # the VMEM buffer); mask it there, and only there.
        is_edge = blk == (total_blocks - 1)
        full_ok = jnp.logical_not(is_edge)
        if may_overrun:
            full_ok = jnp.logical_and(full_ok, blk < total_blocks)

        @pl.when(full_ok)
        def _():
            _accumulate(acc_ref, term)

        @pl.when(is_edge)
        def _():
            valid_rows = h - (total_blocks - 1) * h_tile    # static int
            row = jax.lax.broadcasted_iota(jnp.int32, term.shape, 1)
            _accumulate(acc_ref, jnp.where(row < valid_rows, term, 0.0))
    elif may_overrun:
        @pl.when(blk < total_blocks)
        def _():
            _accumulate(acc_ref, term)
    else:
        _accumulate(acc_ref, term)

    # Finalize this chunk: dump the raw (8, W) partial; cross-lane reduce is
    # done (cheaply, on a tiny array) in the wrapper.
    @pl.when(i == pl.num_programs(1) - 1)
    def _():
        out_ref[0] = acc_ref[...]


def wce_loss(pred, targets, *, target_step_bytes=4 * 1024 * 1024):
    """pred: [B, 2, H, W] probabilities, targets: [B, H, W] -> scalar f32 loss."""
    B, C, H, W = pred.shape
    assert C == 2, "WCE expects 2-channel predictions"
    assert targets.shape == (B, H, W)

    # ---- Tile selection: full batch + full W per block, tile along H. ----
    bytes_per_row = B * W * 3 * 4          # p0 + p1 + targets, f32, per H row
    rows_target = max(8, target_step_bytes // max(1, bytes_per_row))
    if rows_target >= H:
        h_tile = H                         # single block along H (any H ok)
    else:
        n_blocks = -(-H // rows_target)
        h_tile = min(_round_up(-(-H // n_blocks), 8), H)
    # TODO(synk): if a single 8-row slab (B*8*W*12B) ever exceeds VMEM, tile
    # the batch dim as well; not needed for the shapes this module targets.
    total_blocks = -(-H // h_tile)

    # Leading chunk axis (2 when possible) so a dual-TensorCore part can split
    # the work; odd block counts use uneven chunks (guarded in-kernel).
    num_chunks = 2 if total_blocks >= 2 else 1
    inner_steps = -(-total_blocks // num_chunks)
    may_overrun = num_chunks * inner_steps > total_blocks

    def _blk(c, i):
        b = c * inner_steps + i
        if may_overrun:
            b = jnp.minimum(b, total_blocks - 1)   # clamp the overrun step
        return b

    kernel = functools.partial(
        _wce_kernel, h=H, h_tile=h_tile, total_blocks=total_blocks,
        inner_steps=inner_steps, may_overrun=may_overrun)

    partials = pl.pallas_call(
        kernel,
        out_shape=jax.ShapeDtypeStruct((num_chunks, 8, W), jnp.float32),
        grid_spec=pltpu.PrefetchScalarGridSpec(
            num_scalar_prefetch=0,
            grid=(num_chunks, inner_steps),
            in_specs=[
                # pred fed once, as-is; channels sliced in-kernel.
                pl.BlockSpec((B, 2, h_tile, W),
                             lambda c, i: (0, 0, _blk(c, i), 0)),
                pl.BlockSpec((B, h_tile, W),
                             lambda c, i: (0, _blk(c, i), 0)),
            ],
            out_specs=pl.BlockSpec((1, 8, W), lambda c, i: (c, 0, 0)),
            scratch_shapes=[pltpu.VMEM((8, W), jnp.float32)],
        ),
        compiler_params=pltpu.CompilerParams(
            dimension_semantics=("parallel", "arbitrary"),
            vmem_limit_bytes=32 * 1024 * 1024,
        ),
    )(pred, targets)

    total_n = B * H * W
    return -jnp.sum(partials) / jnp.float32(total_n)


def wce_reference(pred, targets):
    p1 = pred[:, 1, :, :]
    p0 = pred[:, 0, :, :]
    return -jnp.mean(
        targets * jnp.log(p1 + _EPS) + (1.0 - targets) * jnp.log(p0 + _EPS)
    )


if __name__ == "__main__":
    key = jax.random.PRNGKey(0)
    k1, k2, k3, k4 = jax.random.split(key, 4)

    # Primary small-shape check, consistent with the module:
    # pred [B, 2, H, W], targets [B, H, W].
    B, H, W = 2, 16, 16
    logits = jax.random.normal(k1, (B, 2, H, W), dtype=jnp.float32)
    pred = jax.nn.softmax(logits, axis=1)        # probabilities over 2 channels
    targets = (jax.random.uniform(k2, (B, H, W)) > 0.5).astype(jnp.float32)

    loss = wce_loss(pred, targets)
    jax.block_until_ready(loss)
    ref = wce_reference(pred, targets)
    assert jnp.allclose(loss, ref, rtol=1e-5, atol=1e-5), (loss, ref)

    # Secondary check exercising H tiling, 2-chunk partials, the ragged
    # boundary mask and the uneven-chunk (overrun) guard, via a small forced
    # per-step byte budget.
    B2, H2, W2 = 2, 40, 128
    logits2 = jax.random.normal(k3, (B2, 2, H2, W2), dtype=jnp.float32)
    pred2 = jax.nn.softmax(logits2, axis=1)
    targets2 = (jax.random.uniform(k4, (B2, H2, W2)) > 0.5).astype(jnp.float32)

    loss2 = wce_loss(pred2, targets2, target_step_bytes=16 * B2 * W2 * 12)
    jax.block_until_ready(loss2)
    ref2 = wce_reference(pred2, targets2)
    assert jnp.allclose(loss2, ref2, rtol=1e-5, atol=1e-5), (loss2, ref2)

    print("KERNEL_OK")
</pallas_src>

<mosaic_0001>
module attributes {stable_mosaic.version = 11 : i64} {
  func.func @_wce_kernel(%arg0: i32, %arg1: i32, %arg2: memref<2x2x16x16xf32, #tpu.memory_space<vmem>>, %arg3: memref<2x16x16xf32, #tpu.memory_space<vmem>>, %arg4: memref<1x8x16xf32, #tpu.memory_space<vmem>>, %arg5: memref<8x16xf32, #tpu.memory_space<vmem>>) attributes {dimension_semantics = [#tpu.dimension_semantics<parallel>, #tpu.dimension_semantics<arbitrary>], iteration_bounds = array<i64: 1, 1>, scalar_prefetch = 0 : i64, scratch_operands = 1 : i64, tpu.core_type = #tpu.core_type<tc>, window_params = [{transform_indices = @transform_0, window_bounds = array<i64: 2, 2, 16, 16>}, {transform_indices = @transform_1, window_bounds = array<i64: 2, 16, 16>}, {transform_indices = @transform_2, window_bounds = array<i64: 1, 8, 16>}]} {
    %c0_i32 = arith.constant 0 : i32
    %0 = arith.cmpi eq, %arg1, %c0_i32 : i32
    %1 = arith.extui %0 : i1 to i32
    %c0_i32_0 = arith.constant 0 : i32
    %2 = arith.cmpi ne, %1, %c0_i32_0 : i32
    scf.if %2 {
      %cst_20 = arith.constant 0.000000e+00 : f32
      %28 = vector.broadcast %cst_20 : f32 to vector<8x16xf32>
      %c0_21 = arith.constant 0 : index
      %c0_22 = arith.constant 0 : index
      %29 = vector.load %arg5[%c0_21, %c0_22] : memref<8x16xf32, #tpu.memory_space<vmem>>, vector<8x16xf32>
      tpu.vector_store %arg5[%c0_21, %c0_22], %28 {strides = array<i32>} : memref<8x16xf32, #tpu.memory_space<vmem>>, vector<8x16xf32>,
    } else {
    }
    %c0 = arith.constant 0 : index
    %c0_1 = arith.constant 0 : index
    %c0_2 = arith.constant 0 : index
    %3 = vector.load %arg3[%c0, %c0_1, %c0_2] : memref<2x16x16xf32, #tpu.memory_space<vmem>>, vector<2x16x16xf32>
    %c0_3 = arith.constant 0 : index
    %c0_4 = arith.constant 0 : index
    %c0_5 = arith.constant 0 : index
    %c0_6 = arith.constant 0 : index
    %4 = vector.load %arg2[%c0_3, %c0_4, %c0_5, %c0_6] : memref<2x2x16x16xf32, #tpu.memory_space<vmem>>, vector<2x1x16x16xf32>
    %5 = vector.shape_cast %4 : vector<2x1x16x16xf32> to vector<2x16x16xf32>
    %c0_7 = arith.constant 0 : index
    %c1 = arith.constant 1 : index
    %c0_8 = arith.constant 0 : index
    %c0_9 = arith.constant 0 : index
    %6 = vector.load %arg2[%c0_7, %c1, %c0_8, %c0_9] : memref<2x2x16x16xf32, #tpu.memory_space<vmem>>, vector<2x1x16x16xf32>
    %7 = vector.shape_cast %6 : vector<2x1x16x16xf32> to vector<2x16x16xf32>
    %cst = arith.constant 9.99999974E-6 : f32
    %8 = vector.broadcast %cst : f32 to vector<2x16x16xf32>
    %9 = arith.addf %7, %8 : vector<2x16x16xf32>
    %10 = math.log %9 : vector<2x16x16xf32>
    %11 = arith.mulf %3, %10 : vector<2x16x16xf32>
    %cst_10 = arith.constant 1.000000e+00 : f32
    %12 = vector.broadcast %cst_10 : f32 to vector<2x16x16xf32>
    %13 = arith.subf %12, %3 : vector<2x16x16xf32>
    %cst_11 = arith.constant 9.99999974E-6 : f32
    %14 = vector.broadcast %cst_11 : f32 to vector<2x16x16xf32>
    %15 = arith.addf %5, %14 : vector<2x16x16xf32>
    %16 = math.log %15 : vector<2x16x16xf32>
    %17 = arith.mulf %13, %16 : vector<2x16x16xf32>
    %18 = arith.addf %11, %17 : vector<2x16x16xf32>
    %cst_12 = arith.constant dense<0.000000e+00> : vector<16x16xf32>
    %19 = vector.multi_reduction <add>, %18, %cst_12 [0] : vector<2x16x16xf32> to vector<16x16xf32>
    %c0_13 = arith.constant 0 : index
    %c0_14 = arith.constant 0 : index
    %20 = vector.load %arg5[%c0_13, %c0_14] : memref<8x16xf32, #tpu.memory_space<vmem>>, vector<8x16xf32>
    %21 = vector.shape_cast %19 : vector<16x16xf32> to vector<2x8x16xf32>
    %cst_15 = arith.constant dense<0.000000e+00> : vector<8x16xf32>
    %22 = vector.multi_reduction <add>, %21, %cst_15 [0] : vector<2x8x16xf32> to vector<8x16xf32>
    %23 = arith.addf %20, %22 : vector<8x16xf32>
    %c0_16 = arith.constant 0 : index
    %c0_17 = arith.constant 0 : index
    %24 = vector.load %arg5[%c0_16, %c0_17] : memref<8x16xf32, #tpu.memory_space<vmem>>, vector<8x16xf32>
    tpu.vector_store %arg5[%c0_16, %c0_17], %23 {strides = array<i32>} : memref<8x16xf32, #tpu.memory_space<vmem>>, vector<8x16xf32>,
    %c0_i32_18 = arith.constant 0 : i32
    %25 = arith.cmpi eq, %arg1, %c0_i32_18 : i32
    %26 = arith.extui %25 : i1 to i32
    %c0_i32_19 = arith.constant 0 : i32
    %27 = arith.cmpi ne, %26, %c0_i32_19 : i32
    scf.if %27 {
      %c0_20 = arith.constant 0 : index
      %c0_21 = arith.constant 0 : index
      %28 = vector.load %arg5[%c0_20, %c0_21] : memref<8x16xf32, #tpu.memory_space<vmem>>, vector<8x16xf32>
      %c0_22 = arith.constant 0 : index
      %c0_23 = arith.constant 0 : index
      %c0_24 = arith.constant 0 : index
      %29 = vector.load %arg4[%c0_22, %c0_23, %c0_24] : memref<1x8x16xf32, #tpu.memory_space<vmem>>, vector<1x8x16xf32>
      %30 = vector.shape_cast %29 : vector<1x8x16xf32> to vector<8x16xf32>
      %31 = vector.shape_cast %28 : vector<8x16xf32> to vector<1x8x16xf32>
      tpu.vector_store %arg4[%c0_22, %c0_23, %c0_24], %31 {strides = array<i32>} : memref<1x8x16xf32, #tpu.memory_space<vmem>>, vector<1x8x16xf32>,
    } else {
    }
    return
  }
  func.func @transform_0(%arg0: i32, %arg1: i32) -> (i32, i32, i32, i32) {
    %c1_i32 = arith.constant 1 : i32
    %0 = arith.muli %arg0, %c1_i32 : i32
    %1 = arith.addi %0, %arg1 : i32
    %c0_i32 = arith.constant 0 : i32
    %c0_i32_0 = arith.constant 0 : i32
    %c0_i32_1 = arith.constant 0 : i32
    %c0_i32_2 = arith.constant 0 : i32
    return %c0_i32, %c0_i32_0, %1, %c0_i32_1 : i32, i32, i32, i32
  }
  func.func @transform_1(%arg0: i32, %arg1: i32) -> (i32, i32, i32) {
    %c1_i32 = arith.constant 1 : i32
    %0 = arith.muli %arg0, %c1_i32 : i32
    %1 = arith.addi %0, %arg1 : i32
    %c0_i32 = arith.constant 0 : i32
    %c0_i32_0 = arith.constant 0 : i32
    %c0_i32_1 = arith.constant 0 : i32
    return %c0_i32, %1, %c0_i32_0 : i32, i32, i32
  }
  func.func @transform_2(%arg0: i32, %arg1: i32) -> (i32, i32, i32) {
    %c0_i32 = arith.constant 0 : i32
    %c0_i32_0 = arith.constant 0 : i32
    %c0_i32_1 = arith.constant 0 : i32
    return %arg0, %c0_i32, %c0_i32_0 : i32, i32, i32
  }
}

</mosaic_0001>

<llo_original>
// kernel: tpu_custom_call.1
$region0: #{tpu_custom_call.1}
  #allocation0 [shape = 'u32[]', space=smem, size = 0x4, offset = 0x4, fixed_abs, tag = 'smem constant byte address 0x4 - core index']
  #allocation1 [shape = 'u32[72,128]{1,0:T(1,128)}', space=vmem, size = 0x9000, scoped, tag = 'internal scratch']
  #allocation2 [shape = 'f32[8,16]{1,0:T(8,128)}', space=vmem, size = 0x1000, scoped, tag = 'scratch operand']
  %s0 = inlined_call_operand.hbm [shape: f32[2,2,16,16], index: 0, kind: input, shape index: {}]
  %s1 = inlined_call_operand.hbm [shape: f32[2,16,16], index: 1, kind: input, shape index: {}]
  %s2 = inlined_call_operand.hbm [shape: f32[1,8,16], index: 2, kind: output, shape index: {}]
  %s3 = sld [smem:[#allocation0]]
  $region34: #{tpu_custom_call.1} parent=0
    _
  %s5 = ssub.s32 1, %s3
  %s6 = scalar_select 0, %s5, %s3
  $region1: #{tpu_custom_call.1} parent=0
    #allocation3 [shape = 'u8[32768]{0}', space=vmem, size = 0x8000, scoped, tag = 'input window, operand 0, single buffered']
    #allocation4 [shape = 's32[1]{0}', space=sflag, size = 0x4, scoped, tag = 'scoped memory for tpu_custom_call.1']
    #allocation5 [shape = 's32[1]{0}', space=sflag, size = 0x4, scoped, tag = 'scoped memory for tpu_custom_call.1']
    #allocation6 [shape = 'u8[16384]{0}', space=vmem, size = 0x4000, scoped, tag = 'input window, operand 1, single buffered']
    #allocation7 [shape = 's32[1]{0}', space=sflag, size = 0x4, scoped, tag = 'scoped memory for tpu_custom_call.1']
    #allocation8 [shape = 'u8[4096]{0}', space=vmem, size = 0x1000, scoped, tag = 'output window, operand 0, single buffered']
    %7 = vsyncpa [#allocation4], 0
    %8 = vsyncpa [#allocation7], 0
    %9 = vsyncpa [#allocation5], 0
    // Predicated region
    $region2: #{tpu_custom_call.1} parent=1 // pred_check
      _
    $region3: #{tpu_custom_call.1} parent=1 // pred_check_branch
      %11 = sbr.rel (0) target = $region5
    $region4: #{tpu_custom_call.1} parent=1 // pred_region
      %s12 = sadd.s32 0, 0
      %s13 = smul.u32 2, %s12
      %15 = vsyncadd [#allocation4], 0
      %s16 = smul.addr %s13, 8
      %s17 = scalar_lea.hbm %s0, %s16
      %s18 = sshll.u32 %s17, 4
      %s19 = int_to_ptr.hbm [resolvable:$true] %s18
      %s20 = sshll.u32 [#allocation3], 4
      %s21 = int_to_ptr.vmem [resolvable:$true] %s20
      %26 = dma.hbm_to_vmem [thread:$0]  %s19, 1024, %s21, [#allocation4], 128, 128, 8
    $region5: #{tpu_custom_call.1} parent=1 // pred_fallthru
      _
    // Predicated region
    $region6: #{tpu_custom_call.1} parent=1 // pred_check
      _
    $region7: #{tpu_custom_call.1} parent=1 // pred_check_branch
      %28 = sbr.rel (0) target = $region9
    $region8: #{tpu_custom_call.1} parent=1 // pred_region
      %s29 = sadd.s32 0, 0
      %s30 = smul.u32 2, %s29
      %32 = vsyncadd [#allocation7], 0
      %s33 = smul.addr %s30, 8
      %s34 = scalar_lea.hbm %s1, %s33
      %s35 = sshll.u32 %s34, 4
      %s36 = int_to_ptr.hbm [resolvable:$true] %s35
      %s37 = sshll.u32 [#allocation6], 4
      %s38 = int_to_ptr.vmem [resolvable:$true] %s37
      %43 = dma.hbm_to_vmem [thread:$0]  %s36, 512, %s38, [#allocation7], 128, 128, 8
    $region9: #{tpu_custom_call.1} parent=1 // pred_fallthru
      _
    // Predicated region
    $region10: #{tpu_custom_call.1} parent=1 // pred_check
      _
    $region11: #{tpu_custom_call.1} parent=1 // pred_check_branch
      %45 = sbr.rel (0) target = $region13
    $region12: #{tpu_custom_call.1} parent=1 // pred_region
      %47 = dma.done [#allocation4], 1024
    $region13: #{tpu_custom_call.1} parent=1 // pred_fallthru
      _
    // Predicated region
    $region14: #{tpu_custom_call.1} parent=1 // pred_check
      _
    $region15: #{tpu_custom_call.1} parent=1 // pred_check_branch
      %49 = sbr.rel (0) target = $region17
    $region16: #{tpu_custom_call.1} parent=1 // pred_region
      %51 = dma.done [#allocation7], 512
    $region17: #{tpu_custom_call.1} parent=1 // pred_fallthru
      _
    %s52 = sadd.s32 0, 0
    %s53 = smul.u32 2, %s52
    %s54 = sadd.s32 0, 0
    %s55 = smul.u32 2, %s54
    %p56 = scmp.eq.s32.totalorder 0, 0
    // Predicated region
    $region18: #{tpu_custom_call.1} parent=1 // pred_check
      %p57 = pneg %p56
    $region19: #{tpu_custom_call.1} parent=1 // pred_check_branch
      %59 = sbr.rel (%p57) target = $region21
    $region20: #{tpu_custom_call.1} parent=1 // pred_region
      %vm60 = vcmask 130048
      %61 = vst.msk [vmem:[#allocation2] sm:$0xff] %vm60, 0.0
    $region21: #{tpu_custom_call.1} parent=1 // pred_fallthru
      _
    %v62 = vld [vmem:[#allocation6] sm:$0xff]
    %v63 = vld [vmem:[#allocation6 + $0x8] sm:$0xff]
    %v64 = vld [vmem:[#allocation6 + $0x10] sm:$0xff]
    %v65 = vld [vmem:[#allocation6 + $0x18] sm:$0xff]
    %v66 = vld [vmem:[#allocation3] sm:$0xff]
    %v67 = vld [vmem:[#allocation3 + $0x8] sm:$0xff]
    %v68 = vld [vmem:[#allocation3 + $0x20] sm:$0xff]
    %v69 = vld [vmem:[#allocation3 + $0x28] sm:$0xff]
    %s70 = scalar_lea.vmem [#allocation3], 16
    %v71 = vld [vmem:[%s70] sm:$0xff]
    %v72 = vld [vmem:[%s70 + $0x8] sm:$0xff]
    %v73 = vld [vmem:[%s70 + $0x20] sm:$0xff]
    %v74 = vld [vmem:[%s70 + $0x28] sm:$0xff]
    %v75 = vadd.f32 %v71, 1e-05
    %v76 = vadd.f32 %v72, 1e-05
    %v77 = vadd.f32 %v73, 1e-05
    %v78 = vadd.f32 %v74, 1e-05
    %v79 = vlog2.pop %v75
    %v80 = vmul.f32 %v79, 0.6931472
    %v81 = vlog2.pop %v76
    %v82 = vmul.f32 %v81, 0.6931472
    %v83 = vlog2.pop %v77
    %v84 = vmul.f32 %v83, 0.6931472
    %v85 = vlog2.pop %v78
    %v86 = vmul.f32 %v85, 0.6931472
    %v87 = vmul.f32 %v62, %v80
    %v88 = vmul.f32 %v63, %v82
    %v89 = vmul.f32 %v64, %v84
    %v90 = vmul.f32 %v65, %v86
    %v91 = vsub.f32 1.0, %v62
    %v92 = vsub.f32 1.0, %v63
    %v93 = vsub.f32 1.0, %v64
    %v94 = vsub.f32 1.0, %v65
    %v95 = vadd.f32 %v66, 1e-05
    %v96 = vadd.f32 %v67, 1e-05
    %v97 = vadd.f32 %v68, 1e-05
    %v98 = vadd.f32 %v69, 1e-05
    %v99 = vlog2.pop %v95
    %v100 = vmul.f32 %v99, 0.6931472
    %v101 = vlog2.pop %v96
    %v102 = vmul.f32 %v101, 0.6931472
    %v103 = vlog2.pop %v97
    %v104 = vmul.f32 %v103, 0.6931472
    %v105 = vlog2.pop %v98
    %v106 = vmul.f32 %v105, 0.6931472
    %v107 = vmul.f32 %v91, %v100
    %v108 = vmul.f32 %v92, %v102
    %v109 = vmul.f32 %v93, %v104
    %v110 = vmul.f32 %v94, %v106
    %v111 = vadd.f32 %v87, %v107
    %v112 = vadd.f32 %v88, %v108
    %v113 = vadd.f32 %v89, %v109
    %v114 = vadd.f32 %v90, %v110
    %vm115 = vcmask 130048
    %v116 = vsel %vm115, %v111, 0.0
    %v117 = vsel %vm115, %v113, 0.0
    %v118 = vadd.f32 %v116, %v117
    %v119 = vsel %vm115, %v112, 0.0
    %v120 = vsel %vm115, %v114, 0.0
    %v121 = vadd.f32 %v119, %v120
    %v122 = vld [vmem:[#allocation2] sm:$0xff]
    %v123 = vsel %vm115, %v118, 0.0
    %v124 = vsel %vm115, %v121, 0.0
    %v125 = vadd.f32 %v123, %v124
    %v126 = vadd.f32 %v122, %v125
    %127 = vst.msk [vmem:[#allocation2] sm:$0xff] %vm115, %v126
    // Predicated region
    $region22: #{tpu_custom_call.1} parent=1 // pred_check
      %p128 = pneg %p56
    $region23: #{tpu_custom_call.1} parent=1 // pred_check_branch
      %130 = sbr.rel (%p128) target = $region25
    $region24: #{tpu_custom_call.1} parent=1 // pred_region
      %v131 = vld [vmem:[#allocation2] sm:$0xff]
      %132 = vst.msk [vmem:[#allocation8] sm:$0xff] %vm115, %v131
    $region25: #{tpu_custom_call.1} parent=1 // pred_fallthru
      _
    // Predicated region
    $region26: #{tpu_custom_call.1} parent=1 // pred_check
      _
    $region27: #{tpu_custom_call.1} parent=1 // pred_check_branch
      %134 = sbr.rel (0) target = $region29
    $region28: #{tpu_custom_call.1} parent=1 // pred_region
      %136 = vsyncadd [#allocation5], 0
      %s138 = sshll.u32 [#allocation8], 4
      %s139 = int_to_ptr.vmem [resolvable:$true] %s138
      %s140 = sshll.u32 %s2, 4
      %s141 = int_to_ptr.hbm [resolvable:$true] %s140
      %143 = dma.vmem_to_hbm [thread:$0]  %s139, 128, %s141, [#allocation5]
    $region29: #{tpu_custom_call.1} parent=1 // pred_fallthru
      _
    // Predicated region
    $region30: #{tpu_custom_call.1} parent=1 // pred_check
      _
    $region31: #{tpu_custom_call.1} parent=1 // pred_check_branch
      %145 = sbr.rel (0) target = $region33
    $region32: #{tpu_custom_call.1} parent=1 // pred_region
      %147 = dma.done [#allocation5], 128
    $region33: #{tpu_custom_call.1} parent=1 // pred_fallthru
      _
    %148 = vsyncpa [#allocation4], 1
    %149 = vsyncpa [#allocation7], 1
    %150 = vsyncpa [#allocation5], 1

</llo_original>
